<compile_context>
chip_gen: v6e
topology: v6e:2x2x1
jax: 0.10.0
libtpu: 0.0.40
codegen_flags: <defaults>
</compile_context>

<pallas_src>
import math

import jax
import jax.numpy as jnp
from jax.experimental import pallas as pl
from jax.experimental.pallas import tpu as pltpu


def _expand_kernel(inp_ref, out_ref):
    # Pure copy when block shapes match; otherwise an in-VMEM broadcast along
    # the axes whose input block is size 1 (broadcast axes in the last 2 dims).
    out_ref[...] = jnp.broadcast_to(inp_ref[...], out_ref.shape)


_LANE_BLOCK_BYTES = 512 * 1024     # max bytes carried by the last (lane) block dim
_SMALL_OUTPUT_BYTES = 1 << 20      # below ~1 MiB, let XLA fuse the broadcast


def _vmem_budget():
    """Return (per-output-block byte budget, vmem_limit_bytes) for this chip."""
    try:
        cap = int(pltpu.get_tpu_info().vmem_capacity_bytes)
    except Exception:
        cap = 64 * 1024 * 1024     # conservative: v7x per-TensorCore capacity
    if cap >= 100 * 1024 * 1024:
        # v5e / v6e: 128 MiB VMEM per TC.  Worst case (no broadcast in the
        # last-two dims) buffered footprint = 4 x block <= 32 MiB <= 64 MiB.
        return 8 * 1024 * 1024, 64 * 1024 * 1024
    # v7x (64 MiB per TC) or unknown: 4 MiB blocks => <= 16 MiB buffered,
    # comfortably inside the 32 MiB scoped limit.
    return 4 * 1024 * 1024, 32 * 1024 * 1024


def _collapse_runs(in_shape, tgt_shape):
    """Collapse consecutive axes with the same broadcast behaviour."""
    runs = []  # (tgt_size, in_size, is_broadcast)
    for s_in, s_tg in zip(in_shape, tgt_shape):
        b = (s_in == 1 and s_tg != 1)
        if runs and runs[-1][2] == b:
            t, i, _ = runs[-1]
            runs[-1] = (t * s_tg, i * s_in, b)
        else:
            runs.append((s_tg, s_in, b))
    while len(runs) < 2:               # keep at least 2 dims for TPU tiling
        runs.insert(0, (1, 1, False))
    return runs


def _pick_lane_block(t, lane_cap_elems):
    """Lane block: full extent if it fits, else a full-width multiple of 128
    that divides the extent (no ragged masked-store tail) when reasonable."""
    if t <= lane_cap_elems:
        return t
    cap = max(128, (lane_cap_elems // 128) * 128)
    c = cap
    min_ok = max(128, cap // 4)
    while c >= min_ok:
        if t % c == 0:
            return c
        c -= 128
    return cap


def _choose_blocks(c_tgt, itemsize, budget_bytes):
    """Lane-dense, VMEM-budgeted, dtype-aware block shape for the output."""
    nd = len(c_tgt)
    blocks = [1] * nd
    sub_mult = max(8, 32 // itemsize)   # f32->8, bf16/f16->16, int8/fp8->32

    # Cap the lane-dim bytes so the minimum sublane tile never overruns budget.
    lane_cap_elems = max(128, min(_LANE_BLOCK_BYTES, budget_bytes // sub_mult) // itemsize)
    blocks[-1] = _pick_lane_block(c_tgt[-1], lane_cap_elems)

    budget_elems = max(1, budget_bytes // itemsize)
    remaining = max(1, budget_elems // blocks[-1])

    # Second-to-last (sublane) dim: full extent or a multiple of the packed tile.
    t = c_tgt[-2]
    blk = min(t, remaining)
    if blk < t:
        blk = max(sub_mult, (blk // sub_mult) * sub_mult)
    blocks[-2] = blk
    remaining = max(1, remaining // blocks[-2])

    # Leading dims: no tiling constraint; grow within the remaining budget.
    for d in range(nd - 3, -1, -1):
        blk = max(1, min(c_tgt[d], remaining))
        blocks[d] = blk
        remaining = max(1, remaining // blk)

    return blocks, sub_mult


def expand_as(inp, shape_src, *, use_pallas=None):
    """`inp.expand_as(shape_src)`. `shape_src` may be an array (only its static
    shape is used, matching the torch module) or a plain shape tuple/list."""
    tgt_shape = (tuple(shape_src.shape) if hasattr(shape_src, "shape")
                 else tuple(shape_src))

    # torch.expand semantics: right-align ranks (add leading size-1 dims).
    if inp.ndim < len(tgt_shape):
        inp = inp.reshape((1,) * (len(tgt_shape) - inp.ndim) + inp.shape)
    assert inp.ndim == len(tgt_shape), "expand_as: input rank exceeds target rank"
    for s_in, s_tg in zip(inp.shape, tgt_shape):
        assert s_in == 1 or s_in == s_tg, (
            f"expand_as: cannot expand dim of size {s_in} to {s_tg}")

    itemsize = jnp.dtype(inp.dtype).itemsize
    total = math.prod(tgt_shape) if tgt_shape else 1
    if (total == 0 or use_pallas is False
            or (use_pallas is None and total * itemsize < _SMALL_OUTPUT_BYTES)):
        # Tiny/empty output: a materialized Pallas copy can't beat XLA fusion.
        return jnp.broadcast_to(inp, tgt_shape)

    # Collapse runs so the trailing lane dimension is as dense as possible.
    runs = _collapse_runs(inp.shape, tgt_shape)
    c_tgt = tuple(r[0] for r in runs)
    c_in = tuple(r[1] for r in runs)
    bcast = tuple(r[2] for r in runs)
    nd = len(runs)

    budget_bytes, vmem_limit = _vmem_budget()
    blocks, sub_mult = _choose_blocks(c_tgt, itemsize, budget_bytes)

    # Megacore (v7x): if the whole collapsed output landed in a single large
    # block, split it so there is a parallel grid axis of extent >= 2.
    out_block_bytes = math.prod(blocks) * itemsize
    if (out_block_bytes >= (2 << 20)
            and all(pl.cdiv(t, b) == 1 for t, b in zip(c_tgt, blocks))):
        split = False
        for d in range(nd - 2):                 # leading dims: no constraints
            if c_tgt[d] >= 2:
                blocks[d] = (c_tgt[d] + 1) // 2
                split = True
                break
        if not split and c_tgt[-2] >= 2 * sub_mult:
            half = -(-((c_tgt[-2] + 1) // 2) // sub_mult) * sub_mult
            if half < c_tgt[-2]:
                blocks[-2] = half

    out_block = tuple(blocks)
    # Broadcast axes keep a size-1 input block (== full input extent): the
    # input tile is fetched once per distinct non-broadcast index and the
    # replication happens via the index_map / in-VMEM broadcast.
    in_block = tuple(1 if b else ob for ob, b in zip(out_block, bcast))
    grid_sizes = tuple(pl.cdiv(t, ob) for t, ob in zip(c_tgt, out_block))

    # Grid order: non-broadcast axes outermost (largest extent first, so the
    # v7x megacore has a big shardable parallel axis); broadcast axes
    # innermost so the input block index is constant across consecutive grid
    # steps and Pallas keeps the input tile resident (each distinct input
    # block is DMA'd from HBM exactly once).
    non_b = sorted([d for d in range(nd) if not bcast[d]],
                   key=lambda d: -grid_sizes[d])
    bca = [d for d in range(nd) if bcast[d]]
    perm = non_b + bca                        # grid-axis -> array-axis
    pos = {ax: p for p, ax in enumerate(perm)}  # array-axis -> grid position
    grid = tuple(grid_sizes[ax] for ax in perm)

    def out_index_map(*gidx):
        return tuple(gidx[pos[d]] for d in range(nd))

    def in_index_map(*gidx):
        return tuple(0 if bcast[d] else gidx[pos[d]] for d in range(nd))

    out_c = pl.pallas_call(
        _expand_kernel,
        out_shape=jax.ShapeDtypeStruct(c_tgt, inp.dtype),
        grid=grid,
        in_specs=[pl.BlockSpec(in_block, in_index_map)],
        out_specs=pl.BlockSpec(out_block, out_index_map),
        compiler_params=pltpu.CompilerParams(
            dimension_semantics=("parallel",) * nd,  # independent output tiles
            vmem_limit_bytes=vmem_limit,
        ),
    )(inp.reshape(c_in))

    return out_c.reshape(tgt_shape)


if __name__ == "__main__":
    key = jax.random.PRNGKey(0)
    k_inp, k_src = jax.random.split(key)

    # Demo shapes from the module's test: inp (2,1,16) expanded to (2,4,16).
    inp = jax.random.normal(k_inp, (2, 1, 16), dtype=jnp.float32)
    shape_src = jax.random.normal(k_src, (2, 4, 16), dtype=jnp.float32)

    out = jax.block_until_ready(expand_as(inp, shape_src, use_pallas=True))
    ref = jnp.broadcast_to(inp, shape_src.shape)
    assert out.shape == shape_src.shape
    assert out.dtype == inp.dtype
    assert bool(jnp.array_equal(out, ref))

    # Larger case: leading non-broadcast grid axis (index_map replication,
    # multi-step pipeline), trailing dims collapsed to a lane-dense block.
    inp2 = jax.random.normal(k_inp, (4, 1, 256, 512), dtype=jnp.float32)
    tgt2 = (4, 8, 256, 512)
    out2 = jax.block_until_ready(expand_as(inp2, tgt2))
    assert bool(jnp.array_equal(out2, jnp.broadcast_to(inp2, tgt2)))

    # Broadcast-leading case: replication axis iterates innermost, lane dim
    # tiled across grid steps -> input block fetched once per lane chunk.
    inp3 = jax.random.normal(k_src, (1, 256, 1024), dtype=jnp.float32)
    tgt3 = (16, 256, 1024)
    out3 = jax.block_until_ready(expand_as(inp3, tgt3))
    assert bool(jnp.array_equal(out3, jnp.broadcast_to(inp3, tgt3)))

    # Sub-32-bit dtype: exercises the dtype-aware (16-row) sublane rounding.
    inp4 = jax.random.normal(k_inp, (1, 256, 256), dtype=jnp.bfloat16)
    tgt4 = (16, 256, 256)
    out4 = jax.block_until_ready(expand_as(inp4, tgt4, use_pallas=True))
    assert bool(jnp.array_equal(out4, jnp.broadcast_to(inp4, tgt4)))

    print("KERNEL_OK")
</pallas_src>

<mosaic_0001>
module attributes {stable_mosaic.version = 11 : i64} {
  func.func @_expand_kernel(%arg0: i32, %arg1: i32, %arg2: i32, %arg3: memref<2x1x16xf32, #tpu.memory_space<vmem>>, %arg4: memref<2x4x16xf32, #tpu.memory_space<vmem>>) attributes {dimension_semantics = [#tpu.dimension_semantics<parallel>, #tpu.dimension_semantics<parallel>, #tpu.dimension_semantics<parallel>], iteration_bounds = array<i64: 1, 1, 1>, scalar_prefetch = 0 : i64, scratch_operands = 0 : i64, tpu.core_type = #tpu.core_type<tc>, window_params = [{transform_indices = @transform_0, window_bounds = array<i64: 2, 1, 16>}, {transform_indices = @transform_1, window_bounds = array<i64: 2, 4, 16>}]} {
    %c0 = arith.constant 0 : index
    %c0_0 = arith.constant 0 : index
    %c0_1 = arith.constant 0 : index
    %0 = vector.load %arg3[%c0, %c0_0, %c0_1] : memref<2x1x16xf32, #tpu.memory_space<vmem>>, vector<2x1x16xf32>
    %1 = vector.shape_cast %0 : vector<2x1x16xf32> to vector<2x1x16xf32>
    %2 = vector.broadcast %1 : vector<2x1x16xf32> to vector<2x4x16xf32>
    %c0_2 = arith.constant 0 : index
    %c0_3 = arith.constant 0 : index
    %c0_4 = arith.constant 0 : index
    %3 = vector.load %arg4[%c0_2, %c0_3, %c0_4] : memref<2x4x16xf32, #tpu.memory_space<vmem>>, vector<2x4x16xf32>
    tpu.vector_store %arg4[%c0_2, %c0_3, %c0_4], %2 {strides = array<i32>} : memref<2x4x16xf32, #tpu.memory_space<vmem>>, vector<2x4x16xf32>,
    return
  }
  func.func @transform_0(%arg0: i32, %arg1: i32, %arg2: i32) -> (i32, i32, i32) {
    %c0_i32 = arith.constant 0 : i32
    %c0_i32_0 = arith.constant 0 : i32
    return %arg0, %c0_i32, %arg1 : i32, i32, i32
  }
  func.func @transform_1(%arg0: i32, %arg1: i32, %arg2: i32) -> (i32, i32, i32) {
    %c0_i32 = arith.constant 0 : i32
    return %arg0, %arg2, %arg1 : i32, i32, i32
  }
}

</mosaic_0001>

<llo_original>
// kernel: tpu_custom_call.1
$region0: #{tpu_custom_call.1}
  #allocation0 [shape = 'u32[]', space=smem, size = 0x4, offset = 0x4, fixed_abs, tag = 'smem constant byte address 0x4 - core index']
  #allocation1 [shape = 'u32[144,128]{1,0:T(1,128)}', space=vmem, size = 0x12000, scoped, tag = 'internal scratch']
  %s0 = inlined_call_operand.hbm [shape: f32[2,1,16], index: 0, kind: input, shape index: {}]
  %s1 = inlined_call_operand.hbm [shape: f32[2,4,16], index: 1, kind: output, shape index: {}]
  %s2 = sld [smem:[#allocation0]]
  $region18: #{tpu_custom_call.1} parent=0
    _
  %s4 = ssub.s32 1, %s2
  %s5 = scalar_select 0, %s4, %s2
  $region1: #{tpu_custom_call.1} parent=0
    #allocation2 [shape = 'u8[1024]{0}', space=vmem, size = 0x400, scoped, tag = 'input window, operand 0, single buffered']
    #allocation3 [shape = 's32[1]{0}', space=sflag, size = 0x4, scoped, tag = 'scoped memory for tpu_custom_call.1']
    #allocation4 [shape = 's32[1]{0}', space=sflag, size = 0x4, scoped, tag = 'scoped memory for tpu_custom_call.1']
    #allocation5 [shape = 'u8[4096]{0}', space=vmem, size = 0x1000, scoped, tag = 'output window, operand 0, single buffered']
    %6 = vsyncpa [#allocation3], 0
    %7 = vsyncpa [#allocation4], 0
    // Predicated region
    $region2: #{tpu_custom_call.1} parent=1 // pred_check
      _
    $region3: #{tpu_custom_call.1} parent=1 // pred_check_branch
      %9 = sbr.rel (0) target = $region5
    $region4: #{tpu_custom_call.1} parent=1 // pred_region
      %s11 = ssub.s32 32, 32
      %12 = vsyncadd [#allocation3], %s11
      %s13 = sshll.u32 [#allocation2], 4
      %s14 = int_to_ptr.vmem [resolvable:$true] %s13
      %19 = dma.hbm_to_vmem [thread:$0]  %s0, 32, %s14, [#allocation3], 16, 16, 1
    $region5: #{tpu_custom_call.1} parent=1 // pred_fallthru
      _
    // Predicated region
    $region6: #{tpu_custom_call.1} parent=1 // pred_check
      _
    $region7: #{tpu_custom_call.1} parent=1 // pred_check_branch
      %21 = sbr.rel (0) target = $region9
    $region8: #{tpu_custom_call.1} parent=1 // pred_region
      %22 = dma.done [#allocation3], 32
    $region9: #{tpu_custom_call.1} parent=1 // pred_fallthru
      _
    %v23 = vld [vmem:[#allocation2] sm:$0x1]
    %v24 = vld [vmem:[#allocation2 + $0x1] sm:$0x1]
    %v27 = vlaneseq
    %v28 = vshrl.u32 %v27, 7
    %v29 = vsub.s32 0, %v28
    %v30 = vrot.slane %v23, %v29
    %v31 = vlaneseq
    %v32 = vshrl.u32 %v31, 7
    %v33 = vsub.s32 0, %v32
    %v34 = vrot.slane %v24, %v33
    %vm37 = vcmask 125952
    %38 = vst.msk [vmem:[#allocation5] sm:$0xf] %vm37, %v30
    %39 = vst.msk [vmem:[#allocation5 + $0x4] sm:$0xf] %vm37, %v34
    // Predicated region
    $region10: #{tpu_custom_call.1} parent=1 // pred_check
      _
    $region11: #{tpu_custom_call.1} parent=1 // pred_check_branch
      %41 = sbr.rel (0) target = $region13
    $region12: #{tpu_custom_call.1} parent=1 // pred_region
      %s43 = ssub.s32 128, 128
      %44 = vsyncadd [#allocation4], %s43
      %s45 = sshll.u32 [#allocation5], 4
      %s46 = int_to_ptr.vmem [resolvable:$true] %s45
      %51 = dma.vmem_to_hbm [thread:$0]  %s46, 128, %s1, [#allocation4], 64, 64, 4
    $region13: #{tpu_custom_call.1} parent=1 // pred_fallthru
      _
    // Predicated region
    $region14: #{tpu_custom_call.1} parent=1 // pred_check
      _
    $region15: #{tpu_custom_call.1} parent=1 // pred_check_branch
      %53 = sbr.rel (0) target = $region17
    $region16: #{tpu_custom_call.1} parent=1 // pred_region
      %54 = dma.done [#allocation4], 128
    $region17: #{tpu_custom_call.1} parent=1 // pred_fallthru
      _
    %55 = vsyncpa [#allocation3], 1
    %56 = vsyncpa [#allocation4], 1

</llo_original>
